<compile_context>
chip_gen: v6e
topology: v6e:2x2x1
jax: 0.10.0
libtpu: 0.0.40
codegen_flags: <defaults>
</compile_context>

<pallas_src>
import jax
import jax.numpy as jnp
from jax.experimental import pallas as pl
from jax.experimental.pallas import tpu as pltpu


def _round_up(x, m):
    return ((x + m - 1) // m) * m


def _linear_kernel(x_ref, wt_ref, b_ref, o_ref):
    # x_ref : [tb, K]           input tile (f32 or bf16, as supplied)
    # wt_ref: [K, n_pad]        weight, pre-transposed on host, class dim padded to 128
    # b_ref : [1, n_classes]    f32 bias (unpadded)
    # o_ref : [tb, n_classes]   f32 logits (unpadded -> small HBM writes)
    acc = jnp.dot(x_ref[...], wt_ref[...], preferred_element_type=jnp.float32)
    n = o_ref.shape[-1]
    # Drop the zero-padded MXU columns in-register; only n_classes lanes hit HBM.
    o_ref[...] = (acc[:, :n] + b_ref[...]).astype(o_ref.dtype)


def gpu_logistic_regression_forward(x, weight, bias, *, block_batch=8192,
                                    x_bytes_per_step=1 << 20):
    """Forward pass of GPULogisticRegression (a single nn.Linear): x @ W^T + b.

    Args:
      x:      [batch, input_dim] (f32, or bf16 if produced upstream in bf16)
      weight: [n_classes, input_dim] f32 (PyTorch nn.Linear layout)
      bias:   [n_classes] f32
      block_batch:      hard cap on the batch tile (multiple of 8).
      x_bytes_per_step: per-grid-step x traffic target used to derive the tile.
    Returns:
      logits: [batch, n_classes] float32
    """
    batch, input_dim = x.shape
    n_classes, k = weight.shape
    assert k == input_dim, "weight/input_dim mismatch"
    out_dtype = jnp.float32

    # MXU-friendly weight operand: pad the class dim to a lane multiple (128) and
    # transpose ONCE on the host (tiny: n_pad*K elements), so the kernel uses the
    # native K-major contraction. Only the tiny weight is cast to x's dtype; x is
    # never re-written in HBM by the wrapper.
    n_pad = _round_up(n_classes, 128)
    w_t = jnp.pad(weight, ((0, n_pad - n_classes), (0, 0))).T.astype(x.dtype)
    b2 = bias.astype(jnp.float32).reshape(1, n_classes)

    # Batch tile: multiple of 8 sublanes, sized so each grid step streams about
    # x_bytes_per_step of x (amortizes per-step pipeline overhead while staying
    # far under the default scoped VMEM limit, double-buffered, on v5e/v6e/v7x).
    in_itemsize = jnp.dtype(x.dtype).itemsize
    tb_budget = max(8, (x_bytes_per_step // (input_dim * in_itemsize)) // 8 * 8)
    tb = min(block_batch, tb_budget, _round_up(batch, 8))
    # v7x megacore: the "parallel" axis only helps if there are >=2 grid steps.
    if batch >= 256 and pl.cdiv(batch, tb) < 2:
        tb = max(8, _round_up(pl.cdiv(batch, 2), 8))
    grid = (pl.cdiv(batch, tb),)   # ragged tail handled by Pallas boundary clipping

    cost = pl.CostEstimate(
        flops=2 * batch * input_dim * n_pad,
        transcendentals=0,
        bytes_accessed=(batch * input_dim * in_itemsize      # x, read once (no pad pass)
                        + input_dim * n_pad * in_itemsize    # resident weight
                        + n_classes * 4                      # bias
                        + batch * n_classes * 4),            # unpadded logits
    )

    return pl.pallas_call(
        _linear_kernel,
        out_shape=jax.ShapeDtypeStruct((batch, n_classes), out_dtype),
        grid_spec=pltpu.PrefetchScalarGridSpec(
            num_scalar_prefetch=0,
            grid=grid,
            in_specs=[
                pl.BlockSpec((tb, input_dim), lambda i: (i, 0)),     # x tile
                pl.BlockSpec((input_dim, n_pad), lambda i: (0, 0)),  # resident W^T
                pl.BlockSpec((1, n_classes), lambda i: (0, 0)),      # bias row
            ],
            out_specs=pl.BlockSpec((tb, n_classes), lambda i: (i, 0)),
        ),
        compiler_params=pltpu.CompilerParams(
            # Independent batch tiles -> shard across TensorCores on v7x.
            dimension_semantics=("parallel",),
        ),
        cost_estimate=cost,
    )(x, w_t, b2)


if __name__ == "__main__":
    key = jax.random.PRNGKey(0)
    kx, kw, kb, kx2, kx3 = jax.random.split(key, 5)

    # Small shapes consistent with the module: input_dim=32, n_classes=2, batch=8.
    batch, input_dim, n_classes = 8, 32, 2
    x = jax.random.normal(kx, (batch, input_dim), dtype=jnp.float32)
    # Deterministic params mimicking nn.Linear's uniform(-1/sqrt(fan_in), 1/sqrt(fan_in))
    bound = 1.0 / jnp.sqrt(jnp.float32(input_dim))
    weight = jax.random.uniform(kw, (n_classes, input_dim), dtype=jnp.float32,
                                minval=-bound, maxval=bound)
    bias = jax.random.uniform(kb, (n_classes,), dtype=jnp.float32,
                              minval=-bound, maxval=bound)
    ref = x @ weight.T + bias

    # 1) f32 path at the module's native tiny shape
    logits = jax.block_until_ready(gpu_logistic_regression_forward(x, weight, bias))
    assert logits.shape == (batch, n_classes)
    assert jnp.allclose(logits, ref, atol=1e-5), "f32 mismatch vs reference"

    # 2) x arriving bf16 from upstream (no wrapper cast of x; weight matched in-wrapper;
    #    f32 accumulation on the MXU)
    logits_bf16 = jax.block_until_ready(
        gpu_logistic_regression_forward(x.astype(jnp.bfloat16), weight, bias))
    assert jnp.allclose(logits_bf16, ref, atol=3e-2, rtol=3e-2), "bf16 mismatch vs reference"

    # 3) non-aligned medium batch: exercises cdiv grid, ragged boundary block, and
    #    the >=2-step split that feeds both v7x TensorCores
    big_batch = 300
    xb = jax.random.normal(kx2, (big_batch, input_dim), dtype=jnp.float32)
    logits_big = jax.block_until_ready(gpu_logistic_regression_forward(xb, weight, bias))
    ref_big = xb @ weight.T + bias
    assert logits_big.shape == (big_batch, n_classes)
    assert jnp.allclose(logits_big, ref_big, atol=1e-4), "tiled mismatch vs reference"

    # 4) large batch: multiple budget-sized (8192-row) tiles plus a ragged tail
    huge_batch = 20000
    xh = jax.random.normal(kx3, (huge_batch, input_dim), dtype=jnp.float32)
    logits_huge = jax.block_until_ready(gpu_logistic_regression_forward(xh, weight, bias))
    ref_huge = xh @ weight.T + bias
    assert logits_huge.shape == (huge_batch, n_classes)
    assert jnp.allclose(logits_huge, ref_huge, atol=1e-4), "large-batch mismatch vs reference"

    print("KERNEL_OK")
</pallas_src>

<mosaic_0001>
module attributes {stable_mosaic.version = 11 : i64} {
  func.func @_linear_kernel(%arg0: i32, %arg1: memref<8x32xf32, #tpu.memory_space<vmem>>, %arg2: memref<32x128xf32, #tpu.memory_space<vmem>>, %arg3: memref<1x2xf32, #tpu.memory_space<vmem>>, %arg4: memref<8x2xf32, #tpu.memory_space<vmem>>) attributes {dimension_semantics = [#tpu.dimension_semantics<parallel>], iteration_bounds = array<i64: 1>, scalar_prefetch = 0 : i64, scratch_operands = 0 : i64, tpu.core_type = #tpu.core_type<tc>, window_params = [{transform_indices = @transform_0, window_bounds = array<i64: 8, 32>}, {pipeline_mode = #tpu.pipeline_mode<synchronous>, transform_indices = @transform_1, window_bounds = array<i64: 32, 128>}, {pipeline_mode = #tpu.pipeline_mode<synchronous>, transform_indices = @transform_2, window_bounds = array<i64: 1, 2>}, {transform_indices = @transform_3, window_bounds = array<i64: 8, 2>}]} {
    %c0 = arith.constant 0 : index
    %c0_0 = arith.constant 0 : index
    %0 = vector.load %arg1[%c0, %c0_0] : memref<8x32xf32, #tpu.memory_space<vmem>>, vector<8x32xf32>
    %c0_1 = arith.constant 0 : index
    %c0_2 = arith.constant 0 : index
    %1 = vector.load %arg2[%c0_1, %c0_2] : memref<32x128xf32, #tpu.memory_space<vmem>>, vector<32x128xf32>
    %cst = arith.constant dense<0.000000e+00> : vector<8x128xf32>
    %2 = tpu.matmul %0, %1, %cst {dimension_numbers = #tpu.dot_dimension_numbers<[1], [0], [0], [1], [0, 0, 1, 1], [], []>} : vector<8x32xf32>, vector<32x128xf32>, vector<8x128xf32> -> vector<8x128xf32>
    %3 = vector.extract_strided_slice %2 {offsets = [0, 0], sizes = [8, 2], strides = [1, 1]} : vector<8x128xf32> to vector<8x2xf32>
    %c0_3 = arith.constant 0 : index
    %c0_4 = arith.constant 0 : index
    %4 = vector.load %arg3[%c0_3, %c0_4] : memref<1x2xf32, #tpu.memory_space<vmem>>, vector<1x2xf32>
    %5 = vector.broadcast %4 : vector<1x2xf32> to vector<8x2xf32>
    %6 = arith.addf %3, %5 : vector<8x2xf32>
    %c0_5 = arith.constant 0 : index
    %c0_6 = arith.constant 0 : index
    %7 = vector.load %arg4[%c0_5, %c0_6] : memref<8x2xf32, #tpu.memory_space<vmem>>, vector<8x2xf32>
    tpu.vector_store %arg4[%c0_5, %c0_6], %6 {strides = array<i32>} : memref<8x2xf32, #tpu.memory_space<vmem>>, vector<8x2xf32>,
    return
  }
  func.func @transform_0(%arg0: i32) -> (i32, i32) {
    %c0_i32 = arith.constant 0 : i32
    %c0_i32_0 = arith.constant 0 : i32
    return %arg0, %c0_i32 : i32, i32
  }
  func.func @transform_1(%arg0: i32) -> (i32, i32) {
    %c0_i32 = arith.constant 0 : i32
    %c0_i32_0 = arith.constant 0 : i32
    %c0_i32_1 = arith.constant 0 : i32
    return %c0_i32, %c0_i32_0 : i32, i32
  }
  func.func @transform_2(%arg0: i32) -> (i32, i32) {
    %c0_i32 = arith.constant 0 : i32
    %c0_i32_0 = arith.constant 0 : i32
    %c0_i32_1 = arith.constant 0 : i32
    return %c0_i32, %c0_i32_0 : i32, i32
  }
  func.func @transform_3(%arg0: i32) -> (i32, i32) {
    %c0_i32 = arith.constant 0 : i32
    %c0_i32_0 = arith.constant 0 : i32
    return %arg0, %c0_i32 : i32, i32
  }
}

</mosaic_0001>

<llo_original>
// kernel: tpu_custom_call.1
$region0: #{tpu_custom_call.1}
  #allocation0 [shape = 'u32[]', space=smem, size = 0x4, offset = 0x4, fixed_abs, tag = 'smem constant byte address 0x4 - core index']
  #allocation1 [shape = 'u32[144,128]{1,0:T(1,128)}', space=vmem, size = 0x12000, scoped, tag = 'internal scratch']
  %s0 = inlined_call_operand.hbm [shape: f32[8,32], index: 0, kind: input, shape index: {}]
  %s1 = inlined_call_operand.hbm [shape: f32[32,128], index: 1, kind: input, shape index: {}]
  %s2 = inlined_call_operand.vmem [shape: f32[1,2], index: 2, kind: input, shape index: {}]
  %s3 = inlined_call_operand.vmem [shape: f32[8,2], index: 3, kind: output, shape index: {}]
  %s4 = sld [smem:[#allocation0]]
  $region30: #{tpu_custom_call.1} parent=0
    _
  %s6 = ssub.s32 1, %s4
  %s7 = scalar_select 0, %s6, %s4
  $region1: #{tpu_custom_call.1} parent=0
    #allocation2 [shape = 'u8[4096]{0}', space=vmem, size = 0x1000, scoped, tag = 'input window, operand 0, single buffered']
    #allocation3 [shape = 's32[1]{0}', space=sflag, size = 0x4, scoped, tag = 'scoped memory for tpu_custom_call.1']
    #allocation4 [shape = 'u8[16384]{0}', space=vmem, size = 0x4000, scoped, tag = 'input window, operand 1, single buffered']
    #allocation5 [shape = 's32[1]{0}', space=sflag, size = 0x4, scoped, tag = 'scoped memory for tpu_custom_call.1']
    %8 = vsyncpa [#allocation3], 0
    %9 = vsyncpa [#allocation5], 0
    // Predicated region
    $region2: #{tpu_custom_call.1} parent=1 // pred_check
      _
    $region3: #{tpu_custom_call.1} parent=1 // pred_check_branch
      %11 = sbr.rel (0) target = $region5
    $region4: #{tpu_custom_call.1} parent=1 // pred_region
      %s13 = ssub.s32 128, 128
      %14 = vsyncadd [#allocation3], %s13
      %s16 = sshll.u32 [#allocation2], 4
      %s17 = int_to_ptr.vmem [resolvable:$true] %s16
      %19 = dma.hbm_to_vmem [thread:$0]  %s0, 128, %s17, [#allocation3]
    $region5: #{tpu_custom_call.1} parent=1 // pred_fallthru
      _
    // Predicated region
    $region6: #{tpu_custom_call.1} parent=1 // pred_check
      _
    $region7: #{tpu_custom_call.1} parent=1 // pred_check_branch
      %21 = sbr.rel (0) target = $region9
    $region8: #{tpu_custom_call.1} parent=1 // pred_region
      %s23 = ssub.s32 512, 512
      %24 = vsyncadd [#allocation5], %s23
      %s25 = sshll.u32 [#allocation4], 4
      %s26 = int_to_ptr.vmem [resolvable:$true] %s25
      %31 = dma.hbm_to_vmem [thread:$0]  %s1, 512, %s26, [#allocation5], 128, 128, 8
    $region9: #{tpu_custom_call.1} parent=1 // pred_fallthru
      _
    // Predicated region
    $region10: #{tpu_custom_call.1} parent=1 // pred_check
      _
    $region11: #{tpu_custom_call.1} parent=1 // pred_check_branch
      %33 = sbr.rel (0) target = $region13
    $region12: #{tpu_custom_call.1} parent=1 // pred_region
      _
    $region13: #{tpu_custom_call.1} parent=1 // pred_fallthru
      _
    // Predicated region
    $region14: #{tpu_custom_call.1} parent=1 // pred_check
      _
    $region15: #{tpu_custom_call.1} parent=1 // pred_check_branch
      %35 = sbr.rel (0) target = $region17
    $region16: #{tpu_custom_call.1} parent=1 // pred_region
      %36 = dma.done [#allocation3], 128
    $region17: #{tpu_custom_call.1} parent=1 // pred_fallthru
      _
    // Predicated region
    $region18: #{tpu_custom_call.1} parent=1 // pred_check
      _
    $region19: #{tpu_custom_call.1} parent=1 // pred_check_branch
      %38 = sbr.rel (0) target = $region21
    $region20: #{tpu_custom_call.1} parent=1 // pred_region
      %39 = dma.done [#allocation5], 512
    $region21: #{tpu_custom_call.1} parent=1 // pred_fallthru
      _
    %v40 = vld [vmem:[#allocation2] sm:$0xff]
    %v41 = vld [vmem:[#allocation4] sm:$0xff]
    %v42 = vld [vmem:[#allocation4 + $0x8] sm:$0xff]
    %v43 = vld [vmem:[#allocation4 + $0x10] sm:$0xff]
    %v44 = vld [vmem:[#allocation4 + $0x18] sm:$0xff]
    %vm45 = vcmask 261120
    %v47 = vsel %vm45, %v40, 0
    %49 = vmatprep.subr.mxu0 0.0
    %50 = vmatpush1.msra.mxu0 0.0
    %51 = vmatprep.subr.mxu0 0.0
    %52 = vmatpush1.msra.mxu0 0.0
    %53 = vmatprep.subr.mxu0 0.0
    %54 = vmatpush1.msra.mxu0 0.0
    %55 = vmatprep.subr.mxu0 0.0
    %56 = vmatpush1.msra.mxu0 0.0
    %57 = vmatprep.subr.mxu0 0.0
    %58 = vmatpush1.msra.mxu0 0.0
    %59 = vmatprep.subr.mxu0 0.0
    %60 = vmatpush1.msra.mxu0 0.0
    %61 = vmatprep.subr.mxu0 0.0
    %62 = vmatpush1.msra.mxu0 0.0
    %63 = vmatprep.subr.mxu0 0.0
    %64 = vmatpush1.msra.mxu0 0.0
    %65 = vmatprep.subr.mxu0 0.0
    %66 = vmatpush1.msra.mxu0 0.0
    %67 = vmatprep.subr.mxu0 0.0
    %68 = vmatpush1.msra.mxu0 0.0
    %69 = vmatprep.subr.mxu0 0.0
    %70 = vmatpush1.msra.mxu0 0.0
    %71 = vmatprep.subr.mxu0 0.0
    %72 = vmatpush1.msra.mxu0 0.0
    %73 = vmatprep.subr.mxu0 0.0
    %74 = vmatpush1.msra.mxu0 %v44
    %75 = vmatprep.subr.mxu0 0.0
    %76 = vmatpush1.msra.mxu0 %v43
    %77 = vmatprep.subr.mxu0 0.0
    %78 = vmatpush1.msra.mxu0 %v42
    %79 = vmatprep.subr.mxu0 0.0
    %80 = vmatpush1.msra.mxu0 %v41
    %81 = vmatprep.subr.mxu0 0.0
    %82 = vmatpush2.msra.mxu0 0.0
    %83 = vmatprep.subr.mxu0 0.0
    %84 = vmatpush2.msra.mxu0 0.0
    %85 = vmatprep.subr.mxu0 0.0
    %86 = vmatpush2.msra.mxu0 0.0
    %87 = vmatprep.subr.mxu0 0.0
    %88 = vmatpush2.msra.mxu0 0.0
    %89 = vmatprep.subr.mxu0 0.0
    %90 = vmatpush2.msra.mxu0 0.0
    %91 = vmatprep.subr.mxu0 0.0
    %92 = vmatpush2.msra.mxu0 0.0
    %93 = vmatprep.subr.mxu0 0.0
    %94 = vmatpush2.msra.mxu0 0.0
    %95 = vmatprep.subr.mxu0 0.0
    %96 = vmatpush2.msra.mxu0 0.0
    %97 = vmatprep.subr.mxu0 0.0
    %98 = vmatpush2.msra.mxu0 0.0
    %99 = vmatprep.subr.mxu0 0.0
    %100 = vmatpush2.msra.mxu0 0.0
    %101 = vmatprep.subr.mxu0 0.0
    %102 = vmatpush2.msra.mxu0 0.0
    %103 = vmatprep.subr.mxu0 0.0
    %104 = vmatpush2.msra.mxu0 0.0
    %105 = vmatprep.subr.mxu0 0.0
    %106 = vmatpush2.msra.mxu0 0.0
    %107 = vmatprep.subr.mxu0 0.0
    %108 = vmatpush2.msra.mxu0 0.0
    %109 = vmatprep.subr.mxu0 0.0
    %110 = vmatpush2.msra.mxu0 0.0
    %111 = vmatprep.subr.mxu0 0.0
    %112 = vmatpush2.msra.mxu0 0.0
    %113 = vmatprep.mubr.f32.mxu0 0.0
    %114 = vmatmul.mubr.f32.gmra.mxu0 %v47
    %v115 = vpop.f32.mrf.mxu0
    %v116 = vadd.f32 0.0, %v115
    %v117 = vpop.f32.mrf.mxu0
    %118 = vdwg.mxu0
    %v119 = vld [vmem:[%s2] sm:$0x1]
    %v121 = vlaneseq
    %v122 = vshrl.u32 %v121, 7
    %v123 = vsub.s32 0, %v122
    %v124 = vrot.slane %v119, %v123
    %v126 = vadd.f32 %v116, %v124
    %vm127 = vcmask 15360
    %128 = vst.msk [vmem:[%s3] sm:$0xff] %vm127, %v126
    // Predicated region
    $region22: #{tpu_custom_call.1} parent=1 // pred_check
      _
    $region23: #{tpu_custom_call.1} parent=1 // pred_check_branch
      %130 = sbr.rel (0) target = $region25
    $region24: #{tpu_custom_call.1} parent=1 // pred_region
      _
    $region25: #{tpu_custom_call.1} parent=1 // pred_fallthru
      _
    // Predicated region
    $region26: #{tpu_custom_call.1} parent=1 // pred_check
      _
    $region27: #{tpu_custom_call.1} parent=1 // pred_check_branch
      %132 = sbr.rel (0) target = $region29
    $region28: #{tpu_custom_call.1} parent=1 // pred_region
      _
    $region29: #{tpu_custom_call.1} parent=1 // pred_fallthru
      _
    %133 = vsyncpa [#allocation3], 1
    %134 = vsyncpa [#allocation5], 1

</llo_original>
